<compile_context>
chip_gen: v6e
topology: v6e:2x2x1
jax: 0.10.0
libtpu: 0.0.40
codegen_flags: <defaults>
</compile_context>

<pallas_src>
import jax
import jax.numpy as jnp
from jax.experimental import pallas as pl
from jax.experimental.pallas import tpu as pltpu


def _gated_fusion_kernel(w_ref, feat_ref, out_ref):
    # w_ref   : (TR, S)     f32 softmax weights per folded (b*C + c) row
    # feat_ref: (S, TR, TN) feature tile (rows on sublanes, points on lanes)
    # out_ref : (TR, TN)
    num_scales = feat_ref.shape[0]
    # Per-scale loads: only one scale tile + acc live at a time (no whole-block
    # f32 temporary).  S is small and static, so the loop is fully unrolled.
    acc = feat_ref[0].astype(jnp.float32) * w_ref[:, 0:1]
    for s in range(1, num_scales):
        acc = acc + feat_ref[s].astype(jnp.float32) * w_ref[:, s:s + 1]
    out_ref[...] = acc.astype(out_ref.dtype)


def _round_up(x, m):
    return ((x + m - 1) // m) * m


def gated_fusion(features_stacked, gates, *,
                 vmem_budget_bytes=20 * 1024 * 1024,
                 vmem_limit_bytes=32 * 1024 * 1024):
    """features_stacked: (S, B, C, N); gates: (S, C) -> (B, C, N)."""
    S, B, C, N = features_stacked.shape
    assert gates.shape == (S, C)
    BC = B * C
    itemsize = jnp.dtype(features_stacked.dtype).itemsize
    sublane = {4: 8, 2: 16, 1: 32}.get(itemsize, 8)

    # Softmax hoisted out of the hot loop (tiny (S, C) op).
    w = jax.nn.softmax(gates.astype(jnp.float32), axis=0)          # (S, C)
    # Per folded-row weights: row r = b*C + c  ->  w_rows[r, s] = w[s, c].
    w_rows = jnp.tile(jnp.transpose(w), (B, 1))                     # (BC, S)

    # Row-fold features: free metadata reshape (row-major contiguous).
    feats2d = features_stacked.reshape(S, BC, N)

    # --- VMEM accounting: double buffers + padded weight block + f32 temps --
    def per_step_bytes(tr, tn):
        tr_pad = _round_up(tr, sublane)
        tn_pad = _round_up(tn, 128)
        feats = 2 * S * tr_pad * tn_pad * itemsize     # double-buffered features
        outb = 2 * tr_pad * tn_pad * itemsize          # double-buffered output
        wts = 2 * _round_up(tr_pad, 8) * 128 * 4       # (tr, S) f32, S pads to 128 lanes
        temps = 2 * tr_pad * tn_pad * 4                # f32 acc + one per-scale temp
        return feats + outb + wts + temps

    # --- tile selection: lanes (N) first, then rows --------------------------
    tn = N                                             # prefer full-N contiguous DMA
    while tn > 128 and per_step_bytes(min(sublane, BC), tn) > vmem_budget_bytes:
        tn = max(128, _round_up(tn // 2, 128))

    if BC <= sublane:
        tr = BC                                        # full-dim exception
    else:
        tr = sublane
        while tr * 2 <= BC and per_step_bytes(tr * 2, tn) <= vmem_budget_bytes:
            tr *= 2
        if per_step_bytes(BC, tn) <= vmem_budget_bytes:
            tr = BC                                    # all rows in one block

    # --- keep the grid at >= 2 steps so v7x megacore uses both cores --------
    if pl.cdiv(BC, tr) * pl.cdiv(N, tn) < 2:
        if BC >= 2 * sublane:
            tr = _round_up(pl.cdiv(BC, 2), sublane)
        elif N >= 256:
            tn = _round_up(pl.cdiv(N, 2), 128)

    grid = (pl.cdiv(BC, tr), pl.cdiv(N, tn))

    # --- weight operand -------------------------------------------------------
    # If the row tile covers whole channel periods, every row block sees the
    # identical (tr, S) weight pattern -> one small tile, constant index_map.
    if tr % C == 0 and tr <= BC:
        w_arg = w_rows[:tr]
        w_spec = pl.BlockSpec((tr, S), lambda r, n: (0, 0))
    else:
        w_arg = w_rows
        w_spec = pl.BlockSpec((tr, S), lambda r, n: (r, 0))

    out2d = pl.pallas_call(
        _gated_fusion_kernel,
        out_shape=jax.ShapeDtypeStruct((BC, N), features_stacked.dtype),
        grid_spec=pltpu.PrefetchScalarGridSpec(
            num_scalar_prefetch=0,
            grid=grid,
            in_specs=[
                w_spec,                                              # weights
                pl.BlockSpec((S, tr, tn), lambda r, n: (0, r, n)),   # features
            ],
            out_specs=pl.BlockSpec((tr, tn), lambda r, n: (r, n)),
        ),
        compiler_params=pltpu.CompilerParams(
            dimension_semantics=("parallel", "parallel"),
            vmem_limit_bytes=vmem_limit_bytes,
        ),
    )(w_arg, feats2d)

    return out2d.reshape(B, C, N)


if __name__ == "__main__":
    key = jax.random.PRNGKey(0)
    k_feat, k_gate = jax.random.split(key)

    # Small, module-consistent shapes: num_scales=3, batch=2, channels=4, points=256.
    S, B, C, N = 3, 2, 4, 256

    # The module's list of per-scale feature tensors, stacked along a new axis 0.
    features = jax.random.normal(k_feat, (S, B, C, N), dtype=jnp.float32)
    # nn.Parameter(torch.zeros(num_scales, channels)); use small random values
    # so the softmax/gating path is actually exercised.
    gates = 0.1 * jax.random.normal(k_gate, (S, C), dtype=jnp.float32)

    out = gated_fusion(features, gates)
    out = jax.block_until_ready(out)

    # Pure-JAX reference for correctness.
    w_ref = jax.nn.softmax(gates, axis=0)[:, None, :, None]         # (S,1,C,1)
    ref = jnp.sum(features * w_ref, axis=0)                         # (B,C,N)
    assert out.shape == (B, C, N)
    assert jnp.allclose(out, ref, atol=1e-5, rtol=1e-5), "mismatch vs reference"

    print("KERNEL_OK")
</pallas_src>

<mosaic_0001>
module attributes {stable_mosaic.version = 11 : i64} {
  func.func @_gated_fusion_kernel(%arg0: i32, %arg1: i32, %arg2: memref<8x3xf32, #tpu.memory_space<vmem>>, %arg3: memref<3x8x128xf32, #tpu.memory_space<vmem>>, %arg4: memref<8x128xf32, #tpu.memory_space<vmem>>) attributes {dimension_semantics = [#tpu.dimension_semantics<parallel>, #tpu.dimension_semantics<parallel>], iteration_bounds = array<i64: 1, 2>, scalar_prefetch = 0 : i64, scratch_operands = 0 : i64, tpu.core_type = #tpu.core_type<tc>, window_params = [{pipeline_mode = #tpu.pipeline_mode<synchronous>, transform_indices = @transform_0, window_bounds = array<i64: 8, 3>}, {transform_indices = @transform_1, window_bounds = array<i64: 3, 8, 128>}, {transform_indices = @transform_2, window_bounds = array<i64: 8, 128>}]} {
    %c0 = arith.constant 0 : index
    %c0_0 = arith.constant 0 : index
    %c0_1 = arith.constant 0 : index
    %0 = vector.load %arg3[%c0, %c0_0, %c0_1] : memref<3x8x128xf32, #tpu.memory_space<vmem>>, vector<1x8x128xf32>
    %1 = vector.shape_cast %0 : vector<1x8x128xf32> to vector<8x128xf32>
    %c0_2 = arith.constant 0 : index
    %c0_3 = arith.constant 0 : index
    %2 = vector.load %arg2[%c0_2, %c0_3] : memref<8x3xf32, #tpu.memory_space<vmem>>, vector<8x1xf32>
    %3 = vector.broadcast %2 : vector<8x1xf32> to vector<8x128xf32>
    %4 = arith.mulf %1, %3 : vector<8x128xf32>
    %c1 = arith.constant 1 : index
    %c0_4 = arith.constant 0 : index
    %c0_5 = arith.constant 0 : index
    %5 = vector.load %arg3[%c1, %c0_4, %c0_5] : memref<3x8x128xf32, #tpu.memory_space<vmem>>, vector<1x8x128xf32>
    %6 = vector.shape_cast %5 : vector<1x8x128xf32> to vector<8x128xf32>
    %c0_6 = arith.constant 0 : index
    %c1_7 = arith.constant 1 : index
    %7 = vector.load %arg2[%c0_6, %c1_7] : memref<8x3xf32, #tpu.memory_space<vmem>>, vector<8x1xf32>
    %8 = vector.broadcast %7 : vector<8x1xf32> to vector<8x128xf32>
    %9 = arith.mulf %6, %8 : vector<8x128xf32>
    %10 = arith.addf %4, %9 : vector<8x128xf32>
    %c2 = arith.constant 2 : index
    %c0_8 = arith.constant 0 : index
    %c0_9 = arith.constant 0 : index
    %11 = vector.load %arg3[%c2, %c0_8, %c0_9] : memref<3x8x128xf32, #tpu.memory_space<vmem>>, vector<1x8x128xf32>
    %12 = vector.shape_cast %11 : vector<1x8x128xf32> to vector<8x128xf32>
    %c0_10 = arith.constant 0 : index
    %c2_11 = arith.constant 2 : index
    %13 = vector.load %arg2[%c0_10, %c2_11] : memref<8x3xf32, #tpu.memory_space<vmem>>, vector<8x1xf32>
    %14 = vector.broadcast %13 : vector<8x1xf32> to vector<8x128xf32>
    %15 = arith.mulf %12, %14 : vector<8x128xf32>
    %16 = arith.addf %10, %15 : vector<8x128xf32>
    %c0_12 = arith.constant 0 : index
    %c0_13 = arith.constant 0 : index
    %17 = vector.load %arg4[%c0_12, %c0_13] : memref<8x128xf32, #tpu.memory_space<vmem>>, vector<8x128xf32>
    tpu.vector_store %arg4[%c0_12, %c0_13], %16 {strides = array<i32>} : memref<8x128xf32, #tpu.memory_space<vmem>>, vector<8x128xf32>,
    return
  }
  func.func @transform_0(%arg0: i32, %arg1: i32) -> (i32, i32) {
    %c0_i32 = arith.constant 0 : i32
    %c0_i32_0 = arith.constant 0 : i32
    %c0_i32_1 = arith.constant 0 : i32
    return %c0_i32, %c0_i32_0 : i32, i32
  }
  func.func @transform_1(%arg0: i32, %arg1: i32) -> (i32, i32, i32) {
    %c0_i32 = arith.constant 0 : i32
    %c0_i32_0 = arith.constant 0 : i32
    return %c0_i32, %arg0, %arg1 : i32, i32, i32
  }
  func.func @transform_2(%arg0: i32, %arg1: i32) -> (i32, i32) {
    %c0_i32 = arith.constant 0 : i32
    return %arg0, %arg1 : i32, i32
  }
}

</mosaic_0001>

<llo_original>
// kernel: tpu_custom_call.1
$region0: #{tpu_custom_call.1}
  #allocation0 [shape = 'u32[]', space=smem, size = 0x4, offset = 0x4, fixed_abs, tag = 'smem constant byte address 0x4 - core index']
  #allocation1 [shape = 'u32[144,128]{1,0:T(1,128)}', space=vmem, size = 0x12000, scoped, tag = 'internal scratch']
  %s0 = inlined_call_operand.vmem [shape: f32[8,3], index: 0, kind: input, shape index: {}]
  %s1 = inlined_call_operand.hbm [shape: f32[3,8,256], index: 1, kind: input, shape index: {}]
  %s2 = inlined_call_operand.hbm [shape: f32[8,256], index: 2, kind: output, shape index: {}]
  %s3 = sld [smem:[#allocation0]]
  $region45: #{tpu_custom_call.1} parent=0
    _
  %s5 = ssub.s32 1, %s3
  %s6 = scalar_select 0, %s5, %s3
  $region1: #{tpu_custom_call.1} parent=0
    #allocation2 [shape = 'u8[24576]{0}', space=vmem, size = 0x6000, scoped, tag = 'input window, operand 1']
    #allocation3 [shape = 's32[2]{0}', space=sflag, size = 0x8, scoped, tag = 'scoped memory for tpu_custom_call.1']
    #allocation4 [shape = 's32[2]{0}', space=sflag, size = 0x8, scoped, tag = 'scoped memory for tpu_custom_call.1']
    #allocation5 [shape = 'u8[8192]{0}', space=vmem, size = 0x2000, scoped, tag = 'output window, operand 0']
    %7 = vsyncpa [#allocation3], 0
    %s8 = scalar_lea.sflag [#allocation3], 1
    %9 = vsyncpa %s8, 0
    %10 = vsyncpa [#allocation4], 0
    %s11 = scalar_lea.sflag [#allocation4], 1
    %12 = vsyncpa %s11, 0
    loop: start=0, step=1, limit=4
    $region2: #{tpu_custom_call.1} parent=1 // loop_pre_header
      _
    $region3: #{tpu_custom_call.1} parent=1 // loop_header
      %s14 = sphi 0, %s18
      %p15 = scmp.ge.s32.totalorder %s14, 4
      %s21 = sphi 0, %s33
      %s22 = sphi 0, %s29
      %s23 = sphi 0, %s21
      %s24 = sphi 0, %s22
      %s25 = sphi 0, %s23
      %s26 = sphi 0, %s24
      %s34 = sphi 0, %s34
      %s36 = sphi 0, %s34
      %s37 = sphi 0, %s36
      %s51 = sphi 0, %s37
      %s59 = sphi 0, %s61
      %s62 = sphi 0, %s59
      %s63 = sphi 0, %s62
      %s79 = sphi 0, %s63
      %s87 = sphi 0, %s89
      %s90 = sphi 0, %s87
      %s91 = sphi 0, %s90
      %s107 = sphi 0, %s91
    $region4: #{tpu_custom_call.1} parent=1 // loop_header_branch
      %17 = sbr.rel (%p15) target = $region8
    $region5: #{tpu_custom_call.1} parent=1 // loop_body
      %s19 = ssub.s32 %s14, 1
      %s20 = ssub.s32 %s14, 2
      %s27 = sadd.s32 1, %s22
      %p28 = scmp.ge.s32.totalorder %s27, 2
      %s29 = scalar_select %p28, 0, %s27
      %s30 = sadd.s32 1, %s21
      %s31 = scalar_select %p28, %s30, %s21
      %p32 = scmp.ge.s32.totalorder %s31, 1
      %s33 = scalar_select %p32, 0, %s31
      %s35 = sadd.s32 %s34, 1
      %p38 = scmp.eq.s32.totalorder %s14, 1
      %p39 = scmp.ne.s32.totalorder %s34, %s36
      %p40 = scmp.eq.s32.totalorder %s14, 0
      %p41 = por %p39, %p40
      %p42 = scmp.ne.s32.totalorder %s34, %s36
      %p43 = scmp.eq.s32.totalorder %s19, 1
      %p44 = por %p42, %p43
      %p45 = scmp.ne.s32.totalorder %s36, %s37
      %p46 = scmp.eq.s32.totalorder %s19, 0
      %p47 = por %p45, %p46
      %p48 = scmp.ne.s32.totalorder %s36, %s37
      %p49 = scmp.eq.s32.totalorder %s20, 1
      %p50 = por %p48, %p49
      %p52 = scmp.ne.s32.totalorder %s37, %s51
      %p53 = scmp.eq.s32.totalorder %s20, 0
      %p54 = por %p52, %p53
      %s55 = ssub.s32 %s21, %s33
      %s56 = ssub.s32 %s22, %s29
      %s57 = sor.u32 %s55, %s56
      %p58 = scmp.eq.s32.totalorder %s57, 0
      %s60 = sadd.s32 %s59, 1
      %s61 = scalar_select %p58, %s59, %s60
      %p64 = pneg %p58
      %p65 = scmp.eq.s32.totalorder %s14, 1
      %p66 = por %p64, %p65
      %p67 = scmp.ne.s32.totalorder %s59, %s62
      %p68 = scmp.eq.s32.totalorder %s14, 0
      %p69 = por %p67, %p68
      %p70 = scmp.ne.s32.totalorder %s59, %s62
      %p71 = scmp.eq.s32.totalorder %s19, 1
      %p72 = por %p70, %p71
      %p73 = scmp.ne.s32.totalorder %s62, %s63
      %p74 = scmp.eq.s32.totalorder %s19, 0
      %p75 = por %p73, %p74
      %p76 = scmp.ne.s32.totalorder %s62, %s63
      %p77 = scmp.eq.s32.totalorder %s20, 1
      %p78 = por %p76, %p77
      %p80 = scmp.ne.s32.totalorder %s63, %s79
      %p81 = scmp.eq.s32.totalorder %s20, 0
      %p82 = por %p80, %p81
      %s83 = ssub.s32 %s21, %s33
      %s84 = ssub.s32 %s22, %s29
      %s85 = sor.u32 %s83, %s84
      %p86 = scmp.eq.s32.totalorder %s85, 0
      %s88 = sadd.s32 %s87, 1
      %s89 = scalar_select %p86, %s87, %s88
      %p92 = pneg %p86
      %p93 = scmp.eq.s32.totalorder %s14, 1
      %p94 = por %p92, %p93
      %p95 = scmp.ne.s32.totalorder %s87, %s90
      %p96 = scmp.eq.s32.totalorder %s14, 0
      %p97 = por %p95, %p96
      %p98 = scmp.ne.s32.totalorder %s87, %s90
      %p99 = scmp.eq.s32.totalorder %s19, 1
      %p100 = por %p98, %p99
      %p101 = scmp.ne.s32.totalorder %s90, %s91
      %p102 = scmp.eq.s32.totalorder %s19, 0
      %p103 = por %p101, %p102
      %p104 = scmp.ne.s32.totalorder %s90, %s91
      %p105 = scmp.eq.s32.totalorder %s20, 1
      %p106 = por %p104, %p105
      %p108 = scmp.ne.s32.totalorder %s91, %s107
      %p109 = scmp.eq.s32.totalorder %s20, 0
      %p110 = por %p108, %p109
      %p111 = scmp.le.s32.totalorder 1, %s14
      %p112 = scmp.lt.s32.totalorder %s14, 3
      %p113 = pnand %p111, %p112
      %p114 = pneg %p113
      // Predicated region
      $region9: #{tpu_custom_call.1} parent=5 // pred_check
        _
      $region10: #{tpu_custom_call.1} parent=5 // pred_check_branch
        %116 = sbr.rel (%p113) target = $region12
      $region11: #{tpu_custom_call.1} parent=5 // pred_region
        %s117 = ssub.s32 %s14, 1
        // Predicated region
        $region13: #{tpu_custom_call.1} parent=11 // pred_check
          %p118 = pneg %p47
        $region14: #{tpu_custom_call.1} parent=11 // pred_check_branch
          %120 = sbr.rel (%p118) target = $region16
        $region15: #{tpu_custom_call.1} parent=11 // pred_region
          _
        $region16: #{tpu_custom_call.1} parent=11 // pred_fallthru
          _
      $region12: #{tpu_custom_call.1} parent=5 // pred_fallthru
        _
      %p121 = scmp.lt.s32.totalorder %s14, 2
      // Predicated region
      $region17: #{tpu_custom_call.1} parent=5 // pred_check
        %p122 = pneg %p121
      $region18: #{tpu_custom_call.1} parent=5 // pred_check_branch
        %124 = sbr.rel (%p122) target = $region20
      $region19: #{tpu_custom_call.1} parent=5 // pred_region
        // Predicated region
        $region21: #{tpu_custom_call.1} parent=19 // pred_check
          %p125 = pneg %p69
        $region22: #{tpu_custom_call.1} parent=19 // pred_check_branch
          %127 = sbr.rel (%p125) target = $region24
        $region23: #{tpu_custom_call.1} parent=19 // pred_region
          %s128 = sand.u32 %s59, 1
          %s129 = scalar_lea.sflag [#allocation3], %s128
          %s130 = sand.u32 %s59, 1
          %s131 = smul.addr %s130, 24
          %s132 = scalar_lea.vmem [#allocation2], %s131
          %s134 = ssub.s32 384, 384
          %135 = vsyncadd %s129, %s134
          %s136 = smul.addr %s21, 2
          %s137 = sadd.s32 %s22, %s136
          %s138 = smul.addr %s137, 128
          %s139 = scalar_lea.hbm %s1, %s138
          %s140 = sshll.u32 %s132, 4
          %s141 = int_to_ptr.vmem [resolvable:$true] %s140
          %146 = dma.hbm_to_vmem [thread:$0]  %s139, 384, %s141, %s129, 256, 128, 8
        $region24: #{tpu_custom_call.1} parent=19 // pred_fallthru
          _
      $region20: #{tpu_custom_call.1} parent=5 // pred_fallthru
        _
      %p147 = scmp.le.s32.totalorder 1, %s14
      %p148 = scmp.lt.s32.totalorder %s14, 3
      %p149 = pnand %p147, %p148
      %p150 = pneg %p149
      // Predicated region
      $region25: #{tpu_custom_call.1} parent=5 // pred_check
        _
      $region26: #{tpu_custom_call.1} parent=5 // pred_check_branch
        %152 = sbr.rel (%p149) target = $region28
      $region27: #{tpu_custom_call.1} parent=5 // pred_region
        %s153 = ssub.s32 %s14, 1
        %s154 = sand.u32 %s62, 1
        %s155 = scalar_lea.sflag [#allocation3], %s154
        %s156 = sand.u32 %s62, 1
        %s157 = smul.addr %s156, 24
        %s158 = scalar_lea.vmem [#allocation2], %s157
        // Predicated region
        $region29: #{tpu_custom_call.1} parent=27 // pred_check
          %p159 = pneg %p75
        $region30: #{tpu_custom_call.1} parent=27 // pred_check_branch
          %161 = sbr.rel (%p159) target = $region32
        $region31: #{tpu_custom_call.1} parent=27 // pred_region
          %162 = dma.done %s155, 384
        $region32: #{tpu_custom_call.1} parent=27 // pred_fallthru
          _
        %p163 = pneg %p47
        %p164 = pneg %p44
        %s165 = sand.u32 %s62, 1
        %s166 = scalar_lea.sflag [#allocation3], %s165
        %s167 = sand.u32 %s62, 1
        %s168 = smul.addr %s167, 24
        %s169 = scalar_lea.vmem [#allocation2], %s168
        %p170 = pneg %p75
        %p171 = pneg %p72
        %p172 = pneg %p103
        %p173 = pneg %p100
        %s174 = sand.u32 %s90, 1
        %s175 = scalar_lea.sflag [#allocation4], %s174
        %s176 = sand.u32 %s90, 1
        %s177 = smul.addr %s176, 8
        %s178 = scalar_lea.vmem [#allocation5], %s177
        %v179 = vld [vmem:[%s158] sm:$0xff]
        %v180 = vld [vmem:[%s0] sm:$0xff]
        %182 = vset.pattern.permute.xlu0 0
        %183 = vperm.xlu0 %182, %v180
        %v184 = vpop.permute.xlu0 %183
        %v186 = vmul.f32 %v179, %v184
        %s187 = scalar_lea.vmem %s158, 8 [#allocation2]
        %v188 = vld [vmem:[%s187] sm:$0xff]
        %189 = vset.pattern.permute.xlu0 1
        %190 = vperm.xlu0 %189, %v180
        %v191 = vpop.permute.xlu0 %190
        %v193 = vmul.f32 %v188, %v191
        %v194 = vadd.f32 %v186, %v193
        %s195 = scalar_lea.vmem %s158, 16 [#allocation2]
        %v196 = vld [vmem:[%s195] sm:$0xff]
        %197 = vset.pattern.permute.xlu0 2
        %198 = vperm.xlu0 %197, %v180
        %v199 = vpop.permute.xlu0 %198
        %v201 = vmul.f32 %v196, %v199
        %v202 = vadd.f32 %v194, %v201
        %203 = vst [vmem:[%s178] sm:$0xff] %v202
        %s204 = sand.u32 %s90, 1
        %s205 = scalar_lea.sflag [#allocation4], %s204
        %s206 = sand.u32 %s90, 1
        %s207 = smul.addr %s206, 8
        %s208 = scalar_lea.vmem [#allocation5], %s207
        // Predicated region
        $region33: #{tpu_custom_call.1} parent=27 // pred_check
          %p209 = pneg %p100
        $region34: #{tpu_custom_call.1} parent=27 // pred_check_branch
          %211 = sbr.rel (%p209) target = $region36
        $region35: #{tpu_custom_call.1} parent=27 // pred_region
          %s213 = ssub.s32 128, 128
          %214 = vsyncadd %s205, %s213
          %s215 = smul.addr %s23, 2
          %s216 = sadd.s32 %s24, %s215
          %s217 = smul.addr %s216, 128
          %s218 = scalar_lea.hbm %s2, %s217
          %s220 = sshll.u32 %s208, 4
          %s221 = int_to_ptr.vmem [resolvable:$true] %s220
          %223 = dma.vmem_to_hbm [thread:$0]  %s221, 128, %s218, %s205
        $region36: #{tpu_custom_call.1} parent=27 // pred_fallthru
          _
      $region28: #{tpu_custom_call.1} parent=5 // pred_fallthru
        _
      %p224 = scmp.le.s32.totalorder 2, %s14
      // Predicated region
      $region37: #{tpu_custom_call.1} parent=5 // pred_check
        %p225 = pneg %p224
      $region38: #{tpu_custom_call.1} parent=5 // pred_check_branch
        %227 = sbr.rel (%p225) target = $region40
      $region39: #{tpu_custom_call.1} parent=5 // pred_region
        %s228 = ssub.s32 %s14, 2
        // Predicated region
        $region41: #{tpu_custom_call.1} parent=39 // pred_check
          %p229 = pneg %p106
        $region42: #{tpu_custom_call.1} parent=39 // pred_check_branch
          %231 = sbr.rel (%p229) target = $region44
        $region43: #{tpu_custom_call.1} parent=39 // pred_region
          %s232 = sand.u32 %s91, 1
          %s233 = scalar_lea.sflag [#allocation4], %s232
          %s234 = sand.u32 %s91, 1
          %s235 = smul.addr %s234, 8
          %s236 = scalar_lea.vmem [#allocation5], %s235
          %237 = dma.done %s233, 128
        $region44: #{tpu_custom_call.1} parent=39 // pred_fallthru
          _
      $region40: #{tpu_custom_call.1} parent=5 // pred_fallthru
        _
    $region6: #{tpu_custom_call.1} parent=1 // loop_footer
      %s18 = sadd.s32 1, %s14
    $region7: #{tpu_custom_call.1} parent=1 // loop_footer_branch
      %13 = sbr.rel target = $region3
    $region8: #{tpu_custom_call.1} parent=1 // loop_exit
      _
    %238 = vsyncpa [#allocation3], 1
    %s239 = scalar_lea.sflag [#allocation3], 1
    %240 = vsyncpa %s239, 1
    %241 = vsyncpa [#allocation4], 1
    %s242 = scalar_lea.sflag [#allocation4], 1
    %243 = vsyncpa %s242, 1

</llo_original>
